<compile_context>
chip_gen: v6e
topology: v6e:2x2x1
jax: 0.10.0
libtpu: 0.0.40
codegen_flags: <defaults>
</compile_context>

<pallas_src>
import math
import functools

import jax
import jax.numpy as jnp
from jax import lax
from jax.experimental import pallas as pl
from jax.experimental.pallas import tpu as pltpu


def _round_up(x, m):
    return ((x + m - 1) // m) * m


def _gelu_exact(x):
    # PyTorch nn.GELU() default is the exact (erf-based) formulation.
    return 0.5 * x * (1.0 + lax.erf(x / math.sqrt(2.0)))


def _pad2d(a, rows, cols):
    """Pad a 2D array with zeros up to (rows, cols); no-op copy if aligned."""
    r, c = a.shape
    if r == rows and c == cols:
        return a
    return jnp.zeros((rows, cols), a.dtype).at[:r, :c].set(a)


def mlp_kernel(x_ref, w1_ref, b1_ref, w2_ref, b2_ref, o_ref, acc_ref):
    """One (batch_tile, hidden_tile) grid step of the fused MLP.

    x_ref  : (TB, K)     batch tile of the input
    w1_ref : (K,  TH)    hidden-tile slab of W1
    b1_ref : (1,  TH)    hidden-tile slab of b1
    w2_ref : (TH, N)     hidden-tile slab of W2
    b2_ref : (1,  N)     full b2
    o_ref  : (TB, N)     output tile (resident across the hidden axis)
    acc_ref: (TB, N) f32 accumulator scratch
    """
    h_idx = pl.program_id(1)

    @pl.when(h_idx == 0)
    def _():
        acc_ref[...] = jnp.zeros_like(acc_ref)

    # matmul 1 (MXU, f32 accumulation) + bias1 + exact GELU for this hidden tile.
    h = jnp.dot(x_ref[...], w1_ref[...], preferred_element_type=jnp.float32)
    a = _gelu_exact(h + b1_ref[...].astype(jnp.float32))

    # matmul 2 partial sum for this hidden tile.
    acc_ref[...] += jnp.dot(
        a.astype(w2_ref.dtype), w2_ref[...], preferred_element_type=jnp.float32
    )

    @pl.when(h_idx == pl.num_programs(1) - 1)
    def _():
        o_ref[...] = (acc_ref[...] + b2_ref[...].astype(jnp.float32)).astype(o_ref.dtype)


@functools.partial(jax.jit, static_argnames=("tb", "th"))
def mlp_forward(x, w1, b1, w2, b2, *, tb=None, th=None):
    """x: (B, in), w1: (in, hid), b1: (1, hid), w2: (hid, out), b2: (1, out)."""
    B, K = x.shape
    K2, H = w1.shape
    H2, N = w2.shape
    assert K == K2 and H == H2 and N == b2.shape[-1] and H == b1.shape[-1]

    # ---- tile / padding selection (lane-dense, MXU/vreg friendly) ----------
    K_pad = _round_up(K, 128)          # reduction dim of matmul 1 (kept whole)
    N_pad = _round_up(N, 128)          # output lanes (kept whole, >=128)
    H_pad = _round_up(H, 128)          # hidden dim, tiled along the grid

    if tb is None:                     # batch tile: multiple of 8, capped
        tb = min(_round_up(B, 8), 256)
    B_pad = _round_up(B, tb)

    if th is None:                     # hidden tile: multiple of 128, capped
        th = min(H_pad, 512)
    H_pad = _round_up(H_pad, th)
    # TODO(synk): for extremely wide in_size/out_size (weight slabs that exceed
    # the per-generation VMEM budget, e.g. v7x 64 MiB), additionally tile K/N;
    # not needed for typical MLP widths.

    xp = _pad2d(x, B_pad, K_pad)
    w1p = _pad2d(w1, K_pad, H_pad)
    b1p = _pad2d(jnp.reshape(b1, (1, H)), 1, H_pad)
    w2p = _pad2d(w2, H_pad, N_pad)
    b2p = _pad2d(jnp.reshape(b2, (1, N)), 1, N_pad)

    grid = (B_pad // tb, H_pad // th)

    out_padded = pl.pallas_call(
        mlp_kernel,
        out_shape=jax.ShapeDtypeStruct((B_pad, N_pad), x.dtype),
        grid_spec=pltpu.PrefetchScalarGridSpec(
            num_scalar_prefetch=0,
            grid=grid,
            in_specs=[
                pl.BlockSpec((tb, K_pad), lambda b, h: (b, 0)),   # x batch tile
                pl.BlockSpec((K_pad, th), lambda b, h: (0, h)),   # W1 hidden slab
                pl.BlockSpec((1, th), lambda b, h: (0, h)),       # b1 hidden slab
                pl.BlockSpec((th, N_pad), lambda b, h: (h, 0)),   # W2 hidden slab
                pl.BlockSpec((1, N_pad), lambda b, h: (0, 0)),    # b2 (whole)
            ],
            out_specs=pl.BlockSpec((tb, N_pad), lambda b, h: (b, 0)),
            scratch_shapes=[pltpu.VMEM((tb, N_pad), jnp.float32)],
        ),
        compiler_params=pltpu.CompilerParams(
            dimension_semantics=("parallel", "arbitrary"),
            vmem_limit_bytes=48 * 1024 * 1024,
        ),
    )(xp, w1p, b1p, w2p, b2p)

    if B_pad == B and N_pad == N:
        return out_padded
    return out_padded[:B, :N]


def init_params(key, in_size, hidden_size, out_size, dtype=jnp.float32):
    # Deterministic init mimicking nn.Linear's uniform(-1/sqrt(fan_in), +1/sqrt(fan_in)).
    k1, k2, k3, k4 = jax.random.split(key, 4)
    lim1 = 1.0 / math.sqrt(in_size)
    lim2 = 1.0 / math.sqrt(hidden_size)
    w1 = jax.random.uniform(k1, (in_size, hidden_size), dtype, -lim1, lim1)
    b1 = jax.random.uniform(k2, (1, hidden_size), dtype, -lim1, lim1)
    w2 = jax.random.uniform(k3, (hidden_size, out_size), dtype, -lim2, lim2)
    b2 = jax.random.uniform(k4, (1, out_size), dtype, -lim2, lim2)
    return w1, b1, w2, b2


if __name__ == "__main__":
    batch, in_size, hidden_size, out_size = 8, 32, 64, 32

    key = jax.random.PRNGKey(0)
    kx, kp = jax.random.split(key)
    x = jax.random.normal(kx, (batch, in_size), jnp.float32)
    w1, b1, w2, b2 = init_params(kp, in_size, hidden_size, out_size)

    out = mlp_forward(x, w1, b1, w2, b2)
    out = jax.block_until_ready(out)

    # Reference check in plain JAX (exact GELU to match PyTorch nn.GELU()).
    h_ref = x @ w1 + b1
    a_ref = 0.5 * h_ref * (1.0 + lax.erf(h_ref / math.sqrt(2.0)))
    ref = a_ref @ w2 + b2
    assert out.shape == (batch, out_size)
    assert jnp.allclose(out, ref, atol=1e-4, rtol=1e-4), float(
        jnp.max(jnp.abs(out - ref))
    )

    print("KERNEL_OK")
</pallas_src>

<mosaic_0001>
module attributes {stable_mosaic.version = 11 : i64} {
  func.func @mlp_kernel(%arg0: i32, %arg1: i32, %arg2: memref<8x128xf32, #tpu.memory_space<vmem>>, %arg3: memref<128x128xf32, #tpu.memory_space<vmem>>, %arg4: memref<1x128xf32, #tpu.memory_space<vmem>>, %arg5: memref<128x128xf32, #tpu.memory_space<vmem>>, %arg6: memref<1x128xf32, #tpu.memory_space<vmem>>, %arg7: memref<8x128xf32, #tpu.memory_space<vmem>>, %arg8: memref<8x128xf32, #tpu.memory_space<vmem>>) attributes {dimension_semantics = [#tpu.dimension_semantics<parallel>, #tpu.dimension_semantics<arbitrary>], iteration_bounds = array<i64: 1, 1>, scalar_prefetch = 0 : i64, scratch_operands = 1 : i64, tpu.core_type = #tpu.core_type<tc>, window_params = [{transform_indices = @transform_0, window_bounds = array<i64: 8, 128>}, {transform_indices = @transform_1, window_bounds = array<i64: 128, 128>}, {transform_indices = @transform_2, window_bounds = array<i64: 1, 128>}, {transform_indices = @transform_3, window_bounds = array<i64: 128, 128>}, {pipeline_mode = #tpu.pipeline_mode<synchronous>, transform_indices = @transform_4, window_bounds = array<i64: 1, 128>}, {transform_indices = @transform_5, window_bounds = array<i64: 8, 128>}]} {
    %c0_i32 = arith.constant 0 : i32
    %0 = arith.cmpi eq, %arg1, %c0_i32 : i32
    %1 = arith.extui %0 : i1 to i32
    %c0_i32_0 = arith.constant 0 : i32
    %2 = arith.cmpi ne, %1, %c0_i32_0 : i32
    scf.if %2 {
      %cst_18 = arith.constant 0.000000e+00 : f32
      %25 = vector.broadcast %cst_18 : f32 to vector<8x128xf32>
      %c0_19 = arith.constant 0 : index
      %c0_20 = arith.constant 0 : index
      %26 = vector.load %arg8[%c0_19, %c0_20] : memref<8x128xf32, #tpu.memory_space<vmem>>, vector<8x128xf32>
      tpu.vector_store %arg8[%c0_19, %c0_20], %25 {strides = array<i32>} : memref<8x128xf32, #tpu.memory_space<vmem>>, vector<8x128xf32>,
    } else {
    }
    %c0 = arith.constant 0 : index
    %c0_1 = arith.constant 0 : index
    %3 = vector.load %arg2[%c0, %c0_1] : memref<8x128xf32, #tpu.memory_space<vmem>>, vector<8x128xf32>
    %c0_2 = arith.constant 0 : index
    %c0_3 = arith.constant 0 : index
    %4 = vector.load %arg3[%c0_2, %c0_3] : memref<128x128xf32, #tpu.memory_space<vmem>>, vector<128x128xf32>
    %cst = arith.constant dense<0.000000e+00> : vector<8x128xf32>
    %5 = tpu.matmul %3, %4, %cst {dimension_numbers = #tpu.dot_dimension_numbers<[1], [0], [0], [1], [0, 0, 1, 1], [], []>} : vector<8x128xf32>, vector<128x128xf32>, vector<8x128xf32> -> vector<8x128xf32>
    %c0_4 = arith.constant 0 : index
    %c0_5 = arith.constant 0 : index
    %6 = vector.load %arg4[%c0_4, %c0_5] : memref<1x128xf32, #tpu.memory_space<vmem>>, vector<1x128xf32>
    %7 = vector.broadcast %6 : vector<1x128xf32> to vector<8x128xf32>
    %8 = arith.addf %5, %7 : vector<8x128xf32>
    %cst_6 = arith.constant 5.000000e-01 : f32
    %9 = vector.broadcast %cst_6 : f32 to vector<8x128xf32>
    %10 = arith.mulf %9, %8 : vector<8x128xf32>
    %cst_7 = arith.constant 1.41421354 : f32
    %11 = vector.broadcast %cst_7 : f32 to vector<8x128xf32>
    %12 = arith.divf %8, %11 : vector<8x128xf32>
    %13 = math.erf %12 : vector<8x128xf32>
    %cst_8 = arith.constant 1.000000e+00 : f32
    %14 = vector.broadcast %cst_8 : f32 to vector<8x128xf32>
    %15 = arith.addf %14, %13 : vector<8x128xf32>
    %16 = arith.mulf %10, %15 : vector<8x128xf32>
    %c0_9 = arith.constant 0 : index
    %c0_10 = arith.constant 0 : index
    %17 = vector.load %arg8[%c0_9, %c0_10] : memref<8x128xf32, #tpu.memory_space<vmem>>, vector<8x128xf32>
    %c0_11 = arith.constant 0 : index
    %c0_12 = arith.constant 0 : index
    %18 = vector.load %arg5[%c0_11, %c0_12] : memref<128x128xf32, #tpu.memory_space<vmem>>, vector<128x128xf32>
    %cst_13 = arith.constant dense<0.000000e+00> : vector<8x128xf32>
    %19 = tpu.matmul %16, %18, %cst_13 {dimension_numbers = #tpu.dot_dimension_numbers<[1], [0], [0], [1], [0, 0, 1, 1], [], []>} : vector<8x128xf32>, vector<128x128xf32>, vector<8x128xf32> -> vector<8x128xf32>
    %20 = arith.addf %17, %19 : vector<8x128xf32>
    %c0_14 = arith.constant 0 : index
    %c0_15 = arith.constant 0 : index
    %21 = vector.load %arg8[%c0_14, %c0_15] : memref<8x128xf32, #tpu.memory_space<vmem>>, vector<8x128xf32>
    tpu.vector_store %arg8[%c0_14, %c0_15], %20 {strides = array<i32>} : memref<8x128xf32, #tpu.memory_space<vmem>>, vector<8x128xf32>,
    %c0_i32_16 = arith.constant 0 : i32
    %22 = arith.cmpi eq, %arg1, %c0_i32_16 : i32
    %23 = arith.extui %22 : i1 to i32
    %c0_i32_17 = arith.constant 0 : i32
    %24 = arith.cmpi ne, %23, %c0_i32_17 : i32
    scf.if %24 {
      %c0_18 = arith.constant 0 : index
      %c0_19 = arith.constant 0 : index
      %25 = vector.load %arg8[%c0_18, %c0_19] : memref<8x128xf32, #tpu.memory_space<vmem>>, vector<8x128xf32>
      %c0_20 = arith.constant 0 : index
      %c0_21 = arith.constant 0 : index
      %26 = vector.load %arg6[%c0_20, %c0_21] : memref<1x128xf32, #tpu.memory_space<vmem>>, vector<1x128xf32>
      %27 = vector.broadcast %26 : vector<1x128xf32> to vector<8x128xf32>
      %28 = arith.addf %25, %27 : vector<8x128xf32>
      %c0_22 = arith.constant 0 : index
      %c0_23 = arith.constant 0 : index
      %29 = vector.load %arg7[%c0_22, %c0_23] : memref<8x128xf32, #tpu.memory_space<vmem>>, vector<8x128xf32>
      tpu.vector_store %arg7[%c0_22, %c0_23], %28 {strides = array<i32>} : memref<8x128xf32, #tpu.memory_space<vmem>>, vector<8x128xf32>,
    } else {
    }
    return
  }
  func.func @transform_0(%arg0: i32, %arg1: i32) -> (i32, i32) {
    %c0_i32 = arith.constant 0 : i32
    %c0_i32_0 = arith.constant 0 : i32
    return %arg0, %c0_i32 : i32, i32
  }
  func.func @transform_1(%arg0: i32, %arg1: i32) -> (i32, i32) {
    %c0_i32 = arith.constant 0 : i32
    %c0_i32_0 = arith.constant 0 : i32
    return %c0_i32, %arg1 : i32, i32
  }
  func.func @transform_2(%arg0: i32, %arg1: i32) -> (i32, i32) {
    %c0_i32 = arith.constant 0 : i32
    %c0_i32_0 = arith.constant 0 : i32
    return %c0_i32, %arg1 : i32, i32
  }
  func.func @transform_3(%arg0: i32, %arg1: i32) -> (i32, i32) {
    %c0_i32 = arith.constant 0 : i32
    %c0_i32_0 = arith.constant 0 : i32
    return %arg1, %c0_i32 : i32, i32
  }
  func.func @transform_4(%arg0: i32, %arg1: i32) -> (i32, i32) {
    %c0_i32 = arith.constant 0 : i32
    %c0_i32_0 = arith.constant 0 : i32
    %c0_i32_1 = arith.constant 0 : i32
    return %c0_i32, %c0_i32_0 : i32, i32
  }
  func.func @transform_5(%arg0: i32, %arg1: i32) -> (i32, i32) {
    %c0_i32 = arith.constant 0 : i32
    %c0_i32_0 = arith.constant 0 : i32
    return %arg0, %c0_i32 : i32, i32
  }
}

</mosaic_0001>

<llo_original>
// kernel: mlp_forward.1
$region0: #{mlp_forward.1}
  #allocation0 [shape = 'u32[]', space=smem, size = 0x4, offset = 0x4, fixed_abs, tag = 'smem constant byte address 0x4 - core index']
  #allocation1 [shape = 'u32[144,128]{1,0:T(1,128)}', space=vmem, size = 0x12000, scoped, tag = 'internal scratch']
  #allocation2 [shape = 'f32[8,128]{1,0:T(8,128)}', space=vmem, size = 0x1000, scoped, tag = 'scratch operand']
  %s0 = inlined_call_operand.vmem [shape: f32[8,128], index: 0, kind: input, shape index: {}]
  %s1 = inlined_call_operand.vmem [shape: f32[128,128], index: 1, kind: input, shape index: {}]
  %s2 = inlined_call_operand.vmem [shape: f32[1,128], index: 2, kind: input, shape index: {}]
  %s3 = inlined_call_operand.vmem [shape: f32[128,128], index: 3, kind: input, shape index: {}]
  %s4 = inlined_call_operand.vmem [shape: f32[1,128], index: 4, kind: input, shape index: {}]
  %s5 = inlined_call_operand.hbm [shape: f32[8,128], index: 5, kind: output, shape index: {}]
  %s6 = sld [smem:[#allocation0]]
  $region38: #{mlp_forward.1} parent=0
    _
  %s8 = ssub.s32 1, %s6
  %s9 = scalar_select 0, %s8, %s6
  $region1: #{mlp_forward.1} parent=0
    #allocation3 [shape = 'u8[4096]{0}', space=vmem, size = 0x1000, scoped, tag = 'output window, operand 0, single buffered']
    #allocation4 [shape = 's32[1]{0}', space=sflag, size = 0x4, scoped, tag = 'scoped memory for mlp_forward.1']
    %10 = vsyncpa [#allocation4], 0
    // Predicated region
    $region2: #{mlp_forward.1} parent=1 // pred_check
      _
    $region3: #{mlp_forward.1} parent=1 // pred_check_branch
      %12 = sbr.rel (0) target = $region5
    $region4: #{mlp_forward.1} parent=1 // pred_region
      _
    $region5: #{mlp_forward.1} parent=1 // pred_fallthru
      _
    // Predicated region
    $region6: #{mlp_forward.1} parent=1 // pred_check
      _
    $region7: #{mlp_forward.1} parent=1 // pred_check_branch
      %14 = sbr.rel (0) target = $region9
    $region8: #{mlp_forward.1} parent=1 // pred_region
      _
    $region9: #{mlp_forward.1} parent=1 // pred_fallthru
      _
    // Predicated region
    $region10: #{mlp_forward.1} parent=1 // pred_check
      _
    $region11: #{mlp_forward.1} parent=1 // pred_check_branch
      %16 = sbr.rel (0) target = $region13
    $region12: #{mlp_forward.1} parent=1 // pred_region
      _
    $region13: #{mlp_forward.1} parent=1 // pred_fallthru
      _
    // Predicated region
    $region14: #{mlp_forward.1} parent=1 // pred_check
      _
    $region15: #{mlp_forward.1} parent=1 // pred_check_branch
      %18 = sbr.rel (0) target = $region17
    $region16: #{mlp_forward.1} parent=1 // pred_region
      _
    $region17: #{mlp_forward.1} parent=1 // pred_fallthru
      _
    // Predicated region
    $region18: #{mlp_forward.1} parent=1 // pred_check
      _
    $region19: #{mlp_forward.1} parent=1 // pred_check_branch
      %20 = sbr.rel (0) target = $region21
    $region20: #{mlp_forward.1} parent=1 // pred_region
      _
    $region21: #{mlp_forward.1} parent=1 // pred_fallthru
      _
    %p21 = scmp.eq.s32.totalorder 0, 0
    // Predicated region
    $region22: #{mlp_forward.1} parent=1 // pred_check
      %p22 = pneg %p21
    $region23: #{mlp_forward.1} parent=1 // pred_check_branch
      %24 = sbr.rel (%p22) target = $region25
    $region24: #{mlp_forward.1} parent=1 // pred_region
      %25 = vst [vmem:[#allocation2] sm:$0xff] 0.0
    $region25: #{mlp_forward.1} parent=1 // pred_fallthru
      _
    %v26 = vld [vmem:[%s0] sm:$0xff]
    %v27 = vld [vmem:[%s1] sm:$0xff]
    %v28 = vld [vmem:[%s1 + $0x8] sm:$0xff]
    %v29 = vld [vmem:[%s1 + $0x10] sm:$0xff]
    %v30 = vld [vmem:[%s1 + $0x18] sm:$0xff]
    %v31 = vld [vmem:[%s1 + $0x20] sm:$0xff]
    %v32 = vld [vmem:[%s1 + $0x28] sm:$0xff]
    %v33 = vld [vmem:[%s1 + $0x30] sm:$0xff]
    %v34 = vld [vmem:[%s1 + $0x38] sm:$0xff]
    %v35 = vld [vmem:[%s1 + $0x40] sm:$0xff]
    %v36 = vld [vmem:[%s1 + $0x48] sm:$0xff]
    %v37 = vld [vmem:[%s1 + $0x50] sm:$0xff]
    %v38 = vld [vmem:[%s1 + $0x58] sm:$0xff]
    %v39 = vld [vmem:[%s1 + $0x60] sm:$0xff]
    %v40 = vld [vmem:[%s1 + $0x68] sm:$0xff]
    %v41 = vld [vmem:[%s1 + $0x70] sm:$0xff]
    %v42 = vld [vmem:[%s1 + $0x78] sm:$0xff]
    %v43 = vld [vmem:[%s2] sm:$0x1]
    %v45 = vlaneseq
    %v46 = vshrl.u32 %v45, 7
    %v47 = vsub.s32 0, %v46
    %v48 = vrot.slane %v43, %v47
    %50 = vmatprep.subr.mxu0 0.0
    %51 = vmatpush1.msra.mxu0 %v42
    %52 = vmatprep.subr.mxu0 0.0
    %53 = vmatpush1.msra.mxu0 %v41
    %54 = vmatprep.subr.mxu0 0.0
    %55 = vmatpush1.msra.mxu0 %v40
    %56 = vmatprep.subr.mxu0 0.0
    %57 = vmatpush1.msra.mxu0 %v39
    %58 = vmatprep.subr.mxu0 0.0
    %59 = vmatpush1.msra.mxu0 %v38
    %60 = vmatprep.subr.mxu0 0.0
    %61 = vmatpush1.msra.mxu0 %v37
    %62 = vmatprep.subr.mxu0 0.0
    %63 = vmatpush1.msra.mxu0 %v36
    %64 = vmatprep.subr.mxu0 0.0
    %65 = vmatpush1.msra.mxu0 %v35
    %66 = vmatprep.subr.mxu0 0.0
    %67 = vmatpush1.msra.mxu0 %v34
    %68 = vmatprep.subr.mxu0 0.0
    %69 = vmatpush1.msra.mxu0 %v33
    %70 = vmatprep.subr.mxu0 0.0
    %71 = vmatpush1.msra.mxu0 %v32
    %72 = vmatprep.subr.mxu0 0.0
    %73 = vmatpush1.msra.mxu0 %v31
    %74 = vmatprep.subr.mxu0 0.0
    %75 = vmatpush1.msra.mxu0 %v30
    %76 = vmatprep.subr.mxu0 0.0
    %77 = vmatpush1.msra.mxu0 %v29
    %78 = vmatprep.subr.mxu0 0.0
    %79 = vmatpush1.msra.mxu0 %v28
    %80 = vmatprep.subr.mxu0 0.0
    %81 = vmatpush1.msra.mxu0 %v27
    %82 = vmatprep.subr.mxu0 0.0
    %83 = vmatpush2.msra.mxu0 0.0
    %84 = vmatprep.subr.mxu0 0.0
    %85 = vmatpush2.msra.mxu0 0.0
    %86 = vmatprep.subr.mxu0 0.0
    %87 = vmatpush2.msra.mxu0 0.0
    %88 = vmatprep.subr.mxu0 0.0
    %89 = vmatpush2.msra.mxu0 0.0
    %90 = vmatprep.subr.mxu0 0.0
    %91 = vmatpush2.msra.mxu0 0.0
    %92 = vmatprep.subr.mxu0 0.0
    %93 = vmatpush2.msra.mxu0 0.0
    %94 = vmatprep.subr.mxu0 0.0
    %95 = vmatpush2.msra.mxu0 0.0
    %96 = vmatprep.subr.mxu0 0.0
    %97 = vmatpush2.msra.mxu0 0.0
    %98 = vmatprep.subr.mxu0 0.0
    %99 = vmatpush2.msra.mxu0 0.0
    %100 = vmatprep.subr.mxu0 0.0
    %101 = vmatpush2.msra.mxu0 0.0
    %102 = vmatprep.subr.mxu0 0.0
    %103 = vmatpush2.msra.mxu0 0.0
    %104 = vmatprep.subr.mxu0 0.0
    %105 = vmatpush2.msra.mxu0 0.0
    %106 = vmatprep.subr.mxu0 0.0
    %107 = vmatpush2.msra.mxu0 0.0
    %108 = vmatprep.subr.mxu0 0.0
    %109 = vmatpush2.msra.mxu0 0.0
    %110 = vmatprep.subr.mxu0 0.0
    %111 = vmatpush2.msra.mxu0 0.0
    %112 = vmatprep.subr.mxu0 0.0
    %113 = vmatpush2.msra.mxu0 0.0
    %114 = vmatprep.mubr.f32.mxu0 0.0
    %115 = vmatmul.mubr.f32.gmra.mxu0 %v26
    %v116 = vpop.f32.mrf.mxu0
    %v117 = vadd.f32 %v48, %v116
    %v118 = vpop.f32.mrf.mxu0
    %119 = vdwg.mxu0
    %v120 = vmul.f32 %v117, 0.5
    %v121 = vrcp.pop 1.4142135
    %v122 = vmul.f32 %v117, %v121
    %v123 = verf.f32.pop %v122
    %v124 = vadd.f32 %v123, 1.0
    %v125 = vmul.f32 %v120, %v124
    %v126 = vld [vmem:[#allocation2] sm:$0xff]
    %v127 = vld [vmem:[%s3] sm:$0xff]
    %v128 = vld [vmem:[%s3 + $0x8] sm:$0xff]
    %v129 = vld [vmem:[%s3 + $0x10] sm:$0xff]
    %v130 = vld [vmem:[%s3 + $0x18] sm:$0xff]
    %v131 = vld [vmem:[%s3 + $0x20] sm:$0xff]
    %v132 = vld [vmem:[%s3 + $0x28] sm:$0xff]
    %v133 = vld [vmem:[%s3 + $0x30] sm:$0xff]
    %v134 = vld [vmem:[%s3 + $0x38] sm:$0xff]
    %v135 = vld [vmem:[%s3 + $0x40] sm:$0xff]
    %v136 = vld [vmem:[%s3 + $0x48] sm:$0xff]
    %v137 = vld [vmem:[%s3 + $0x50] sm:$0xff]
    %v138 = vld [vmem:[%s3 + $0x58] sm:$0xff]
    %v139 = vld [vmem:[%s3 + $0x60] sm:$0xff]
    %v140 = vld [vmem:[%s3 + $0x68] sm:$0xff]
    %v141 = vld [vmem:[%s3 + $0x70] sm:$0xff]
    %v142 = vld [vmem:[%s3 + $0x78] sm:$0xff]
    %143 = vmatprep.subr.mxu0 0.0
    %144 = vmatpush1.msra.mxu0 %v142
    %145 = vmatprep.subr.mxu0 0.0
    %146 = vmatpush1.msra.mxu0 %v141
    %147 = vmatprep.subr.mxu0 0.0
    %148 = vmatpush1.msra.mxu0 %v140
    %149 = vmatprep.subr.mxu0 0.0
    %150 = vmatpush1.msra.mxu0 %v139
    %151 = vmatprep.subr.mxu0 0.0
    %152 = vmatpush1.msra.mxu0 %v138
    %153 = vmatprep.subr.mxu0 0.0
    %154 = vmatpush1.msra.mxu0 %v137
    %155 = vmatprep.subr.mxu0 0.0
    %156 = vmatpush1.msra.mxu0 %v136
    %157 = vmatprep.subr.mxu0 0.0
    %158 = vmatpush1.msra.mxu0 %v135
    %159 = vmatprep.subr.mxu0 0.0
    %160 = vmatpush1.msra.mxu0 %v134
    %161 = vmatprep.subr.mxu0 0.0
    %162 = vmatpush1.msra.mxu0 %v133
    %163 = vmatprep.subr.mxu0 0.0
    %164 = vmatpush1.msra.mxu0 %v132
    %165 = vmatprep.subr.mxu0 0.0
    %166 = vmatpush1.msra.mxu0 %v131
    %167 = vmatprep.subr.mxu0 0.0
    %168 = vmatpush1.msra.mxu0 %v130
    %169 = vmatprep.subr.mxu0 0.0
    %170 = vmatpush1.msra.mxu0 %v129
    %171 = vmatprep.subr.mxu0 0.0
    %172 = vmatpush1.msra.mxu0 %v128
    %173 = vmatprep.subr.mxu0 0.0
    %174 = vmatpush1.msra.mxu0 %v127
    %175 = vmatprep.subr.mxu0 0.0
    %176 = vmatpush2.msra.mxu0 0.0
    %177 = vmatprep.subr.mxu0 0.0
    %178 = vmatpush2.msra.mxu0 0.0
    %179 = vmatprep.subr.mxu0 0.0
    %180 = vmatpush2.msra.mxu0 0.0
    %181 = vmatprep.subr.mxu0 0.0
    %182 = vmatpush2.msra.mxu0 0.0
    %183 = vmatprep.subr.mxu0 0.0
    %184 = vmatpush2.msra.mxu0 0.0
    %185 = vmatprep.subr.mxu0 0.0
    %186 = vmatpush2.msra.mxu0 0.0
    %187 = vmatprep.subr.mxu0 0.0
    %188 = vmatpush2.msra.mxu0 0.0
    %189 = vmatprep.subr.mxu0 0.0
    %190 = vmatpush2.msra.mxu0 0.0
    %191 = vmatprep.subr.mxu0 0.0
    %192 = vmatpush2.msra.mxu0 0.0
    %193 = vmatprep.subr.mxu0 0.0
    %194 = vmatpush2.msra.mxu0 0.0
    %195 = vmatprep.subr.mxu0 0.0
    %196 = vmatpush2.msra.mxu0 0.0
    %197 = vmatprep.subr.mxu0 0.0
    %198 = vmatpush2.msra.mxu0 0.0
    %199 = vmatprep.subr.mxu0 0.0
    %200 = vmatpush2.msra.mxu0 0.0
    %201 = vmatprep.subr.mxu0 0.0
    %202 = vmatpush2.msra.mxu0 0.0
    %203 = vmatprep.subr.mxu0 0.0
    %204 = vmatpush2.msra.mxu0 0.0
    %205 = vmatprep.subr.mxu0 0.0
    %206 = vmatpush2.msra.mxu0 0.0
    %207 = vmatprep.mubr.f32.mxu0 0.0
    %208 = vmatmul.mubr.f32.gmra.mxu0 %v125
    %v209 = vpop.f32.mrf.mxu0
    %v210 = vadd.f32 0.0, %v209
    %v211 = vpop.f32.mrf.mxu0
    %212 = vdwg.mxu0
    %v213 = vadd.f32 %v126, %v210
    %214 = vst [vmem:[#allocation2] sm:$0xff] %v213
    // Predicated region
    $region26: #{mlp_forward.1} parent=1 // pred_check
      %p215 = pneg %p21
    $region27: #{mlp_forward.1} parent=1 // pred_check_branch
      %217 = sbr.rel (%p215) target = $region29
    $region28: #{mlp_forward.1} parent=1 // pred_region
      %v218 = vld [vmem:[#allocation2] sm:$0xff]
      %v219 = vld [vmem:[%s4] sm:$0x1]
      %v221 = vlaneseq
      %v222 = vshrl.u32 %v221, 7
      %v223 = vsub.s32 0, %v222
      %v224 = vrot.slane %v219, %v223
      %v226 = vadd.f32 %v218, %v224
      %227 = vst [vmem:[#allocation3] sm:$0xff] %v226
    $region29: #{mlp_forward.1} parent=1 // pred_fallthru
      _
    // Predicated region
    $region30: #{mlp_forward.1} parent=1 // pred_check
      _
    $region31: #{mlp_forward.1} parent=1 // pred_check_branch
      %229 = sbr.rel (0) target = $region33
    $region32: #{mlp_forward.1} parent=1 // pred_region
      %s231 = ssub.s32 128, 128
      %232 = vsyncadd [#allocation4], %s231
      %s234 = sshll.u32 [#allocation3], 4
      %s235 = int_to_ptr.vmem [resolvable:$true] %s234
      %237 = dma.vmem_to_hbm [thread:$0]  %s235, 128, %s5, [#allocation4]
    $region33: #{mlp_forward.1} parent=1 // pred_fallthru
      _
    // Predicated region
    $region34: #{mlp_forward.1} parent=1 // pred_check
      _
    $region35: #{mlp_forward.1} parent=1 // pred_check_branch
      %239 = sbr.rel (0) target = $region37
    $region36: #{mlp_forward.1} parent=1 // pred_region
      %240 = dma.done [#allocation4], 128
    $region37: #{mlp_forward.1} parent=1 // pred_fallthru
      _
    %241 = vsyncpa [#allocation4], 1

</llo_original>
